<compile_context>
chip_gen: v7x
topology: tpu7x:2x2x1
jax: 0.10.0
libtpu: 0.0.40
codegen_flags: <defaults>
</compile_context>

<pallas_src>
import jax
import jax.numpy as jnp
from jax.experimental import pallas as pl
from jax.experimental.pallas import tpu as pltpu


_TARGET_TILE_BYTES = 2 << 20        # ~2 MiB per input tile
_MAX_NATURAL_LANES = 128 * 1024     # cap for the natural-trailing-dim path


def _ste_kernel(x_ref, o_ref):
    # Pure VPU elementwise hot path: compare against 0, cast bool -> out dtype.
    o_ref[...] = (x_ref[...] > 0).astype(o_ref.dtype)


def _round_up(n, m):
    return ((n + m - 1) // m) * m


def _binarize_2d(x2d, out_dtype):
    """Run the STE kernel over a 2-D view, tiling the row axis."""
    R, C = x2d.shape
    in_item = x2d.dtype.itemsize
    out_item = jnp.dtype(out_dtype).itemsize

    # Rows per block: target ~2 MiB of input per tile. A block row count must
    # be a multiple of 8 unless it equals the full row extent.
    target_rows = max(1, _TARGET_TILE_BYTES // max(1, C * in_item))
    if R <= target_rows:
        tr = R                                    # single full block (always legal)
    else:
        tr = max(8, (min(target_rows, R) // 8) * 8)
    grid_r = pl.cdiv(R, tr)                       # partial last block is masked by Pallas

    # Explicit VMEM budget: double-buffered (in + out) tiles plus headroom.
    tile_bytes = tr * C * (in_item + out_item)
    vmem_limit = min(max(2 * tile_bytes + (8 << 20), 16 << 20), 100 << 20)

    return pl.pallas_call(
        _ste_kernel,
        out_shape=jax.ShapeDtypeStruct((R, C), out_dtype),
        grid=(grid_r,),
        in_specs=[pl.BlockSpec((tr, C), lambda i: (i, 0))],
        out_specs=pl.BlockSpec((tr, C), lambda i: (i, 0)),
        compiler_params=pltpu.CompilerParams(
            dimension_semantics=("parallel",),
            vmem_limit_bytes=vmem_limit,
        ),
        cost_estimate=pl.CostEstimate(
            flops=R * C,
            transcendentals=0,
            bytes_accessed=R * C * (in_item + out_item),
        ),
    )(x2d)


def straight_through_estimator(x, out_dtype=jnp.float32):
    """Forward of StraightThroughEstimator: (x > 0).astype(out_dtype).

    Accepts any shape.  Prefers zero-copy lane-dense 2-D views (no pad / no
    slice), handles ragged row counts with Pallas' partial last block, and only
    pads minimally for shapes with tiny, unaligned trailing dims.
    """
    orig_shape = x.shape
    total = x.size
    if total == 0:
        return jnp.zeros(orig_shape, out_dtype)

    # --- Primary path: lane-dense slab, zero-copy reshape, single HBM pass. ---
    if total % 128 == 0:
        C = 128
        for c in (1024, 512, 256):
            if total % c == 0:
                C = c
                break
        y2d = _binarize_2d(x.reshape(total // C, C), out_dtype)
        return y2d.reshape(orig_shape)

    # --- Natural-layout path: unaligned count but wide trailing dim.        ---
    # Single HBM pass; only the last (<128) lanes of each row use masked vst.
    D = orig_shape[-1] if x.ndim >= 1 else 1
    if x.ndim >= 2 and 128 <= D <= _MAX_NATURAL_LANES:
        y2d = _binarize_2d(x.reshape(total // D, D), out_dtype)
        return y2d.reshape(orig_shape)

    # --- Last resort (tiny / awkward trailing dim, <2-D unaligned):         ---
    # minimal tail pad to a lane-dense slab, then slice the pad back off.
    padded = _round_up(total, 1024)
    flat = jnp.pad(x.reshape(-1), (0, padded - total))
    y2d = _binarize_2d(flat.reshape(padded // 1024, 1024), out_dtype)
    return y2d.reshape(-1)[:total].reshape(orig_shape)


if __name__ == "__main__":
    key = jax.random.PRNGKey(0)

    # NCHW input matching PyTorch conv-style usage: batch=2, channels=4, 16x16.
    x = jax.random.normal(key, (2, 4, 16, 16), dtype=jnp.float32)
    y = jax.block_until_ready(straight_through_estimator(x))
    y_ref = (x > 0).astype(jnp.float32)
    assert y.shape == x.shape
    assert y.dtype == jnp.float32
    assert bool(jnp.all(y == y_ref))

    # Multi-block grid with a partial (masked) last row-block; no padding pass.
    x_mb = jax.random.normal(jax.random.PRNGKey(1), (2, 3, 100, 1024),
                             dtype=jnp.float32)
    y_mb = jax.block_until_ready(straight_through_estimator(x_mb))
    assert bool(jnp.all(y_mb == (x_mb > 0).astype(jnp.float32)))

    # Unaligned element count with trailing dim >= 128: single-pass natural path.
    x_un = jax.random.normal(jax.random.PRNGKey(2), (3, 5, 37, 129),
                             dtype=jnp.float32)
    y_un = jax.block_until_ready(straight_through_estimator(x_un))
    assert bool(jnp.all(y_un == (x_un > 0).astype(jnp.float32)))

    # Awkward 1-D odd length: exercises the minimal pad/slice fallback.
    x_1d = jax.random.normal(jax.random.PRNGKey(3), (1000,), dtype=jnp.float32)
    y_1d = jax.block_until_ready(straight_through_estimator(x_1d))
    assert bool(jnp.all(y_1d == (x_1d > 0).astype(jnp.float32)))

    print("KERNEL_OK")
</pallas_src>

<mosaic_0001>
module attributes {stable_mosaic.version = 11 : i64} {
  func.func @_ste_kernel(%arg0: i32, %arg1: memref<2x1024xf32, #tpu.memory_space<vmem>>, %arg2: memref<2x1024xf32, #tpu.memory_space<vmem>>) attributes {dimension_semantics = [#tpu.dimension_semantics<parallel>], iteration_bounds = array<i64: 1>, scalar_prefetch = 0 : i64, scratch_operands = 0 : i64, tpu.core_type = #tpu.core_type<tc>, window_params = [{transform_indices = @transform_0, window_bounds = array<i64: 2, 1024>}, {transform_indices = @transform_1, window_bounds = array<i64: 2, 1024>}]} {
    %c0 = arith.constant 0 : index
    %c0_0 = arith.constant 0 : index
    %0 = vector.load %arg1[%c0, %c0_0] : memref<2x1024xf32, #tpu.memory_space<vmem>>, vector<2x1024xf32>
    %cst = arith.constant 0.000000e+00 : f32
    %1 = vector.broadcast %cst : f32 to vector<2x1024xf32>
    %2 = arith.cmpf ogt, %0, %1 : vector<2x1024xf32>
    %3 = arith.extui %2 : vector<2x1024xi1> to vector<2x1024xi32>
    %4 = arith.sitofp %3 : vector<2x1024xi32> to vector<2x1024xf32>
    %c0_1 = arith.constant 0 : index
    %c0_2 = arith.constant 0 : index
    %5 = vector.load %arg2[%c0_1, %c0_2] : memref<2x1024xf32, #tpu.memory_space<vmem>>, vector<2x1024xf32>
    tpu.vector_store %arg2[%c0_1, %c0_2], %4 {strides = array<i32>} : memref<2x1024xf32, #tpu.memory_space<vmem>>, vector<2x1024xf32>,
    return
  }
  func.func @transform_0(%arg0: i32) -> (i32, i32) {
    %c0_i32 = arith.constant 0 : i32
    %c0_i32_0 = arith.constant 0 : i32
    return %arg0, %c0_i32 : i32, i32
  }
  func.func @transform_1(%arg0: i32) -> (i32, i32) {
    %c0_i32 = arith.constant 0 : i32
    %c0_i32_0 = arith.constant 0 : i32
    return %arg0, %c0_i32 : i32, i32
  }
}

</mosaic_0001>

<llo_original>
// kernel: tpu_custom_call.1
$region0: #{tpu_custom_call.1}
  #allocation0 [shape = 'u32[]', space=smem, size = 0x4, offset = 0x4, fixed_abs, tag = 'smem constant byte address 0x4 - core index']
  #allocation1 [shape = 'u32[144,128]{1,0:T(1,128)}', space=vmem, size = 0x12000, scoped, tag = 'internal scratch']
  %s0 = inlined_call_operand.hbm [shape: f32[2,1024], index: 0, kind: input, shape index: {}]
  %s1 = inlined_call_operand.hbm [shape: f32[2,1024], index: 1, kind: output, shape index: {}]
  %s2 = sld [smem:[#allocation0]]
  $region18: #{tpu_custom_call.1} parent=0
    _
  %s4 = ssub.s32 1, %s2
  %s5 = scalar_select 0, %s4, %s2
  $region1: #{tpu_custom_call.1} parent=0
    #allocation2 [shape = 'u8[8192]{0}', space=vmem, size = 0x2000, scoped, tag = 'input window, operand 0, single buffered']
    #allocation3 [shape = 's32[1]{0}', space=sflag, size = 0x4, scoped, tag = 'scoped memory for tpu_custom_call.1']
    #allocation4 [shape = 's32[1]{0}', space=sflag, size = 0x4, scoped, tag = 'scoped memory for tpu_custom_call.1']
    #allocation5 [shape = 'u8[8192]{0}', space=vmem, size = 0x2000, scoped, tag = 'output window, operand 0, single buffered']
    %6 = vsyncpa [#allocation3], 0
    %7 = vsyncpa [#allocation4], 0
    // Predicated region
    $region2: #{tpu_custom_call.1} parent=1 // pred_check
      _
    $region3: #{tpu_custom_call.1} parent=1 // pred_check_branch
      %9 = sbr.rel (0) target = $region5
    $region4: #{tpu_custom_call.1} parent=1 // pred_region
      %s11 = ssub.s32 256, 256
      %12 = vsyncadd [#allocation3], %s11
      %s14 = sshll.u32 [#allocation2], 4
      %s15 = int_to_ptr.vmem [resolvable:$true] %s14
      %17 = dma.hbm_to_vmem [thread:$0]  %s0, 256, %s15, [#allocation3]
    $region5: #{tpu_custom_call.1} parent=1 // pred_fallthru
      _
    // Predicated region
    $region6: #{tpu_custom_call.1} parent=1 // pred_check
      _
    $region7: #{tpu_custom_call.1} parent=1 // pred_check_branch
      %19 = sbr.rel (0) target = $region9
    $region8: #{tpu_custom_call.1} parent=1 // pred_region
      %20 = dma.done [#allocation3], 256
    $region9: #{tpu_custom_call.1} parent=1 // pred_fallthru
      _
    %v21 = vld [vmem:[#allocation2] sm:$0xff]
    %v22 = vld [vmem:[#allocation2 + $0x8] sm:$0xff]
    %vm23 = vcmp.gt.f32.partialorder %v21, 0.0
    %vm24 = vcmp.gt.f32.partialorder %v22, 0.0
    %v25 = vsel %vm23, 1, 0
    %v26 = vsel %vm24, 1, 0
    %v27 = vcvt.s32.f32 %v25
    %v28 = vcvt.s32.f32 %v26
    %29 = vst [vmem:[#allocation5] sm:$0xff] %v27
    %30 = vst [vmem:[#allocation5 + $0x8] sm:$0xff] %v28
    // Predicated region
    $region10: #{tpu_custom_call.1} parent=1 // pred_check
      _
    $region11: #{tpu_custom_call.1} parent=1 // pred_check_branch
      %32 = sbr.rel (0) target = $region13
    $region12: #{tpu_custom_call.1} parent=1 // pred_region
      %s34 = ssub.s32 256, 256
      %35 = vsyncadd [#allocation4], %s34
      %s37 = sshll.u32 [#allocation5], 4
      %s38 = int_to_ptr.vmem [resolvable:$true] %s37
      %40 = dma.vmem_to_hbm [thread:$0]  %s38, 256, %s1, [#allocation4]
    $region13: #{tpu_custom_call.1} parent=1 // pred_fallthru
      _
    // Predicated region
    $region14: #{tpu_custom_call.1} parent=1 // pred_check
      _
    $region15: #{tpu_custom_call.1} parent=1 // pred_check_branch
      %42 = sbr.rel (0) target = $region17
    $region16: #{tpu_custom_call.1} parent=1 // pred_region
      %43 = dma.done [#allocation4], 256
    $region17: #{tpu_custom_call.1} parent=1 // pred_fallthru
      _
    %44 = vsyncpa [#allocation3], 1
    %45 = vsyncpa [#allocation4], 1

</llo_original>
